<compile_context>
chip_gen: v7x
topology: tpu7x:2x2x1
jax: 0.10.0
libtpu: 0.0.40
codegen_flags: <defaults>
</compile_context>

<pallas_src>
import jax
import jax.numpy as jnp
from jax.experimental import pallas as pl
from jax.experimental.pallas import tpu as pltpu


def _linear_kernel(x_ref, w_ref, b_ref, o_ref):
    # x_ref: (3, TB) f32 VMEM  -- batch along lanes (lane-dense).
    # w_ref: (3,)    f32 SMEM  -- weight scalars.
    # b_ref: (1,)    f32 SMEM  -- bias scalar.
    # o_ref: (1, TB) f32 VMEM  -- lane-dense output row.
    w0 = w_ref[0]
    w1 = w_ref[1]
    w2 = w_ref[2]
    b = b_ref[0]
    out = x_ref[0:1, :] * w0 + x_ref[1:2, :] * w1 + x_ref[2:3, :] * w2 + b
    o_ref[...] = out.astype(o_ref.dtype)


def ploy_model_forward(x, weight, bias, *, tile_b=1024):
    """x: (B, 3) f32; weight: (1, 3) f32; bias: (1,) f32  ->  (B, 1) f32."""
    B, in_f = x.shape
    out_f = weight.shape[0]
    assert in_f == 3 and out_f == 1

    # Lane-dense layout: batch on the lane axis (plain-JAX glue).
    x_t = x.T  # (3, B)

    if B <= tile_b:
        # Single full-extent block: block shape == array shape, so the
        # (8, 128) divisibility constraint does not apply.
        b_pad, tb = B, B
    else:
        b_pad = pl.cdiv(B, tile_b) * tile_b
        tb = tile_b
        x_t = jnp.pad(x_t, ((0, 0), (0, b_pad - B)))

    grid = (b_pad // tb,)

    out_row = pl.pallas_call(
        _linear_kernel,
        out_shape=jax.ShapeDtypeStruct((1, b_pad), x.dtype),
        grid=grid,
        in_specs=[
            pl.BlockSpec((in_f, tb), lambda i: (0, i)),
            pl.BlockSpec(memory_space=pltpu.MemorySpace.SMEM),
            pl.BlockSpec(memory_space=pltpu.MemorySpace.SMEM),
        ],
        out_specs=pl.BlockSpec((1, tb), lambda i: (0, i)),
        compiler_params=pltpu.CompilerParams(
            dimension_semantics=("parallel",),
            vmem_limit_bytes=16 * 1024 * 1024,
        ),
        cost_estimate=pl.CostEstimate(
            flops=2 * b_pad * in_f + b_pad,
            transcendentals=0,
            bytes_accessed=4 * (in_f * b_pad + b_pad + in_f + out_f),
        ),
    )(x_t, weight.reshape(in_f), bias)

    # Undo the lane-dense layout: (1, b_pad) -> (B, 1).
    return out_row[0, :B].reshape(B, out_f)


if __name__ == "__main__":
    key = jax.random.PRNGKey(0)
    kx, kw, kb, kx2 = jax.random.split(key, 4)

    in_features, out_features = 3, 1

    # Deterministic parameter init (mimics nn.Linear's U(-1/sqrt(fan_in), ...)).
    bound = 1.0 / jnp.sqrt(jnp.float32(in_features))
    weight = jax.random.uniform(
        kw, (out_features, in_features), jnp.float32, -bound, bound
    )
    bias = jax.random.uniform(kb, (out_features,), jnp.float32, -bound, bound)

    # Small batch (single-block path).
    batch = 8
    x = jax.random.normal(kx, (batch, in_features), jnp.float32)
    out = jax.block_until_ready(ploy_model_forward(x, weight, bias))
    ref = x @ weight.T + bias
    assert out.shape == (batch, out_features)
    assert jnp.allclose(out, ref, atol=1e-5, rtol=1e-5)

    # Larger, non-multiple batch (tiled + padded path).
    batch2 = 1543
    x2 = jax.random.normal(kx2, (batch2, in_features), jnp.float32)
    out2 = jax.block_until_ready(ploy_model_forward(x2, weight, bias))
    ref2 = x2 @ weight.T + bias
    assert out2.shape == (batch2, out_features)
    assert jnp.allclose(out2, ref2, atol=1e-5, rtol=1e-5)

    print("KERNEL_OK")
</pallas_src>

<mosaic_0001>
module attributes {stable_mosaic.version = 11 : i64} {
  func.func @_linear_kernel(%arg0: i32, %arg1: memref<3x8xf32, #tpu.memory_space<vmem>>, %arg2: memref<3xf32, #tpu.memory_space<smem>>, %arg3: memref<1xf32, #tpu.memory_space<smem>>, %arg4: memref<1x8xf32, #tpu.memory_space<vmem>>) attributes {dimension_semantics = [#tpu.dimension_semantics<parallel>], iteration_bounds = array<i64: 1>, scalar_prefetch = 0 : i64, scratch_operands = 0 : i64, tpu.core_type = #tpu.core_type<tc>, window_params = [{transform_indices = @transform_0, window_bounds = array<i64: 3, 8>}, {transform_indices = @transform_1, window_bounds = array<i64: 3>}, {transform_indices = @transform_2, window_bounds = array<i64: 1>}, {transform_indices = @transform_3, window_bounds = array<i64: 1, 8>}]} {
    %c0 = arith.constant 0 : index
    %0 = memref.load %arg2[%c0] : memref<3xf32, #tpu.memory_space<smem>>
    %c1 = arith.constant 1 : index
    %1 = memref.load %arg2[%c1] : memref<3xf32, #tpu.memory_space<smem>>
    %c2 = arith.constant 2 : index
    %2 = memref.load %arg2[%c2] : memref<3xf32, #tpu.memory_space<smem>>
    %c0_0 = arith.constant 0 : index
    %3 = memref.load %arg3[%c0_0] : memref<1xf32, #tpu.memory_space<smem>>
    %c0_1 = arith.constant 0 : index
    %c0_2 = arith.constant 0 : index
    %4 = vector.load %arg1[%c0_1, %c0_2] : memref<3x8xf32, #tpu.memory_space<vmem>>, vector<1x8xf32>
    %5 = vector.broadcast %0 : f32 to vector<1x8xf32>
    %6 = arith.mulf %4, %5 : vector<1x8xf32>
    %c1_3 = arith.constant 1 : index
    %c0_4 = arith.constant 0 : index
    %7 = vector.load %arg1[%c1_3, %c0_4] : memref<3x8xf32, #tpu.memory_space<vmem>>, vector<1x8xf32>
    %8 = vector.broadcast %1 : f32 to vector<1x8xf32>
    %9 = arith.mulf %7, %8 : vector<1x8xf32>
    %10 = arith.addf %6, %9 : vector<1x8xf32>
    %c2_5 = arith.constant 2 : index
    %c0_6 = arith.constant 0 : index
    %11 = vector.load %arg1[%c2_5, %c0_6] : memref<3x8xf32, #tpu.memory_space<vmem>>, vector<1x8xf32>
    %12 = vector.broadcast %2 : f32 to vector<1x8xf32>
    %13 = arith.mulf %11, %12 : vector<1x8xf32>
    %14 = arith.addf %10, %13 : vector<1x8xf32>
    %15 = vector.broadcast %3 : f32 to vector<1x8xf32>
    %16 = arith.addf %14, %15 : vector<1x8xf32>
    %c0_7 = arith.constant 0 : index
    %c0_8 = arith.constant 0 : index
    %17 = vector.load %arg4[%c0_7, %c0_8] : memref<1x8xf32, #tpu.memory_space<vmem>>, vector<1x8xf32>
    tpu.vector_store %arg4[%c0_7, %c0_8], %16 {strides = array<i32>} : memref<1x8xf32, #tpu.memory_space<vmem>>, vector<1x8xf32>,
    return
  }
  func.func @transform_0(%arg0: i32) -> (i32, i32) {
    %c0_i32 = arith.constant 0 : i32
    %c0_i32_0 = arith.constant 0 : i32
    return %c0_i32, %arg0 : i32, i32
  }
  func.func @transform_1(%arg0: i32) -> i32 {
    %c0_i32 = arith.constant 0 : i32
    %c0_i32_0 = arith.constant 0 : i32
    return %c0_i32 : i32
  }
  func.func @transform_2(%arg0: i32) -> i32 {
    %c0_i32 = arith.constant 0 : i32
    %c0_i32_0 = arith.constant 0 : i32
    return %c0_i32 : i32
  }
  func.func @transform_3(%arg0: i32) -> (i32, i32) {
    %c0_i32 = arith.constant 0 : i32
    %c0_i32_0 = arith.constant 0 : i32
    return %c0_i32, %arg0 : i32, i32
  }
}

</mosaic_0001>

<llo_original>
// kernel: tpu_custom_call.1
$region0: #{tpu_custom_call.1}
  #allocation0 [shape = 'u32[]', space=smem, size = 0x4, offset = 0x4, fixed_abs, tag = 'smem constant byte address 0x4 - core index']
  #allocation1 [shape = 'u32[144,128]{1,0:T(1,128)}', space=vmem, size = 0x12000, scoped, tag = 'internal scratch']
  #allocation2 [shape = 'f32[1]{0:T(128)S(6)}', space=smem, size = 0x200, scoped, tag = 'scoped memory for tpu_custom_call.1']
  %s0 = inlined_call_operand.hbm [shape: f32[3,8], index: 0, kind: input, shape index: {}]
  %s1 = inlined_call_operand.vmem [shape: f32[3], index: 1, kind: input, shape index: {}]
  %s2 = inlined_call_operand.<no memory space> [shape: f32[1], index: 2, kind: input, shape index: {}]
  %s3 = inlined_call_operand.hbm [shape: f32[1,8], index: 3, kind: output, shape index: {}]
  %s4 = sld [smem:[#allocation0]]
  $region30: #{tpu_custom_call.1} parent=0
    _
  %s6 = ssub.s32 1, %s4
  %s7 = scalar_select 0, %s6, %s4
  %8 = sst [smem:[#allocation2]] %s2
  $region1: #{tpu_custom_call.1} parent=0
    #allocation3 [shape = 'u8[2048]{0}', space=vmem, size = 0x800, scoped, tag = 'input window, operand 0, single buffered']
    #allocation4 [shape = 's32[1]{0}', space=sflag, size = 0x4, scoped, tag = 'scoped memory for tpu_custom_call.1']
    #allocation5 [shape = 's32[1]{0}', space=sflag, size = 0x4, scoped, tag = 'scoped memory for tpu_custom_call.1']
    #allocation6 [shape = 's32[1]{0}', space=sflag, size = 0x4, scoped, tag = 'scoped memory for tpu_custom_call.1']
    #allocation7 [shape = 'u8[512]{0}', space=smem, size = 0x200, scoped, tag = 'input window, operand 1, single buffered']
    #allocation8 [shape = 'u8[512]{0}', space=vmem, size = 0x400, scoped, tag = 'output window, operand 0, single buffered']
    %9 = vsyncpa [#allocation4], 0
    %10 = vsyncpa [#allocation6], 0
    %11 = vsyncpa [#allocation5], 0
    // Predicated region
    $region2: #{tpu_custom_call.1} parent=1 // pred_check
      _
    $region3: #{tpu_custom_call.1} parent=1 // pred_check_branch
      %13 = sbr.rel (0) target = $region5
    $region4: #{tpu_custom_call.1} parent=1 // pred_region
      %s15 = ssub.s32 64, 64
      %16 = vsyncadd [#allocation4], %s15
      %s18 = sshll.u32 [#allocation3], 4
      %s19 = int_to_ptr.vmem [resolvable:$true] %s18
      %21 = dma.hbm_to_vmem [thread:$0]  %s0, 64, %s19, [#allocation4]
    $region5: #{tpu_custom_call.1} parent=1 // pred_fallthru
      _
    // Predicated region
    $region6: #{tpu_custom_call.1} parent=1 // pred_check
      _
    $region7: #{tpu_custom_call.1} parent=1 // pred_check_branch
      %23 = sbr.rel (0) target = $region9
    $region8: #{tpu_custom_call.1} parent=1 // pred_region
      %s25 = ssub.s32 16, 16
      %26 = vsyncadd [#allocation6], %s25
      %s28 = sshll.u32 %s1, 4
      %s29 = int_to_ptr.vmem [resolvable:$true] %s28
      %31 = dma.vmem_to_smem %s29, 16, [#allocation7], [#allocation6]
    $region9: #{tpu_custom_call.1} parent=1 // pred_fallthru
      _
    // Predicated region
    $region10: #{tpu_custom_call.1} parent=1 // pred_check
      _
    $region11: #{tpu_custom_call.1} parent=1 // pred_check_branch
      %33 = sbr.rel (0) target = $region13
    $region12: #{tpu_custom_call.1} parent=1 // pred_region
      _
    $region13: #{tpu_custom_call.1} parent=1 // pred_fallthru
      _
    // Predicated region
    $region14: #{tpu_custom_call.1} parent=1 // pred_check
      _
    $region15: #{tpu_custom_call.1} parent=1 // pred_check_branch
      %35 = sbr.rel (0) target = $region17
    $region16: #{tpu_custom_call.1} parent=1 // pred_region
      %36 = dma.done [#allocation4], 64
    $region17: #{tpu_custom_call.1} parent=1 // pred_fallthru
      _
    // Predicated region
    $region18: #{tpu_custom_call.1} parent=1 // pred_check
      _
    $region19: #{tpu_custom_call.1} parent=1 // pred_check_branch
      %38 = sbr.rel (0) target = $region21
    $region20: #{tpu_custom_call.1} parent=1 // pred_region
      %39 = dma.done [#allocation6], 16
    $region21: #{tpu_custom_call.1} parent=1 // pred_fallthru
      _
    %40 = sfence
    %s41 = sld [smem:[#allocation7]]
    %s42 = sld [smem:[#allocation7 + $0x1]]
    %s43 = sld [smem:[#allocation7 + $0x2]]
    %s44 = sld [smem:[#allocation2]]
    %v45 = vld [vmem:[#allocation3] sm:$0x1]
    %v46 = vstv %s41
    %v47 = vmul.f32 %v45, %v46
    %v48 = vld [vmem:[#allocation3 + $0x1] sm:$0x1]
    %v49 = vstv %s42
    %v50 = vmul.f32 %v48, %v49
    %v51 = vadd.f32 %v47, %v50
    %v52 = vld [vmem:[#allocation3 + $0x2] sm:$0x1]
    %v53 = vstv %s43
    %v54 = vmul.f32 %v52, %v53
    %v55 = vadd.f32 %v51, %v54
    %v56 = vstv %s44
    %v57 = vadd.f32 %v55, %v56
    %vm58 = vcmask 57344
    %59 = vst.msk [vmem:[#allocation8] sm:$0x1] %vm58, %v57
    // Predicated region
    $region22: #{tpu_custom_call.1} parent=1 // pred_check
      _
    $region23: #{tpu_custom_call.1} parent=1 // pred_check_branch
      %61 = sbr.rel (0) target = $region25
    $region24: #{tpu_custom_call.1} parent=1 // pred_region
      %s63 = ssub.s32 16, 16
      %64 = vsyncadd [#allocation5], %s63
      %s66 = sshll.u32 [#allocation8], 4
      %s67 = int_to_ptr.vmem [resolvable:$true] %s66
      %69 = dma.vmem_to_hbm [thread:$0]  %s67, 16, %s3, [#allocation5]
    $region25: #{tpu_custom_call.1} parent=1 // pred_fallthru
      _
    // Predicated region
    $region26: #{tpu_custom_call.1} parent=1 // pred_check
      _
    $region27: #{tpu_custom_call.1} parent=1 // pred_check_branch
      %71 = sbr.rel (0) target = $region29
    $region28: #{tpu_custom_call.1} parent=1 // pred_region
      %72 = dma.done [#allocation5], 16
    $region29: #{tpu_custom_call.1} parent=1 // pred_fallthru
      _
    %73 = vsyncpa [#allocation4], 1
    %74 = vsyncpa [#allocation5], 1
    %75 = vsyncpa [#allocation6], 1

</llo_original>
